<compile_context>
chip_gen: v5e
topology: v5e:2x2
jax: 0.10.0
libtpu: 0.0.40
codegen_flags: <defaults>
</compile_context>

<pallas_src>
import sys

import jax
import jax.numpy as jnp
from jax import lax
from jax.experimental import pallas as pl
from jax.experimental.pallas import tpu as pltpu

EPS = float(sys.float_info.epsilon)  # matches torch.tensor(sys.float_info.epsilon)


# ----------------------------- Pallas kernels --------------------------------
def kron_attention_kernel(fl_ref, w_ref, kt_ref, out_ref):
    """fl_ref: (Bt, C, S)  grad-layer activations, spatially flattened (lane-dense)
       w_ref:  (Bt, C)     per-sample channel weights (spatial mean of the gradient)
       kt_ref: (S, H*W)    transposed Kronecker bilinear-upsample matrix
       out_ref:(Bt, H*W)   min-max normalized attention map (flattened)."""
    # Elementwise path in f32 (no bf16 VALU on v5e); a no-op cast for f32 inputs.
    fl = fl_ref[...].astype(jnp.float32)
    w = w_ref[...].astype(jnp.float32)

    # Ac = relu(sum_c fl * weights): channel (sublane) reduce; lanes are dense since S=Hf*Wf.
    ac = jnp.maximum(jnp.sum(fl * w[:, :, None], axis=1), 0.0)          # (Bt, S)

    # Bilinear upsample of the whole batch tile in one lane-dense MXU matmul (N = H*W >> 128).
    up = jnp.dot(ac, kt_ref[...].astype(jnp.float32),
                 preferred_element_type=jnp.float32)                     # (Bt, P)

    # Per-sample min-max normalize: min and max back-to-back on the same live value,
    # exact reciprocal for parity with the PyTorch divide.
    a_min = jnp.min(up, axis=1, keepdims=True)                           # (Bt, 1)
    a_max = jnp.max(up, axis=1, keepdims=True)                           # (Bt, 1)
    inv = pl.reciprocal(a_max - a_min + EPS)
    out_ref[...] = (up - a_min) * inv


def separable_attention_kernel(fl_ref, w_ref, l_ref, rt_ref, out_ref):
    """Fallback for large H*W where kron(L, R) would not fit in VMEM.
       fl_ref: (Bt, C, Hf, Wf); w_ref: (Bt, C); l_ref: (H, Hf); rt_ref: (Wf, W);
       out_ref: (Bt, H, W)."""
    bt, _, hf, wf = fl_ref.shape
    fl = fl_ref[...].astype(jnp.float32)
    w = w_ref[...].astype(jnp.float32)
    ac = jnp.maximum(jnp.sum(fl * w[:, :, None, None], axis=1), 0.0)     # (Bt, Hf, Wf)

    l = l_ref[...].astype(jnp.float32)                                   # (H, Hf)
    rt = rt_ref[...].astype(jnp.float32)                                 # (Wf, W)

    # First dot batched over the tile via a leading-dim merge (always legal); N = W lane-dense.
    tmp = jnp.dot(ac.reshape(bt * hf, wf), rt,
                  preferred_element_type=jnp.float32).reshape(bt, hf, -1)  # (Bt, Hf, W)

    # TODO(synk): for very large H (e.g. 224) a row-tiled normalize epilogue with a VMEM
    # scratch would bound vreg pressure; the fused epilogue is fine at moderate sizes.
    for b in range(bt):                                                   # small static loop
        up = jnp.dot(l, tmp[b], preferred_element_type=jnp.float32)       # (H, W)
        a_min = jnp.min(up, keepdims=True)
        a_max = jnp.max(up, keepdims=True)
        inv = pl.reciprocal(a_max - a_min + EPS)
        out_ref[b, :, :] = (up - a_min) * inv


# -------------------------- upsample matrices --------------------------------
def bilinear_matrix(out_size, in_size):
    """Interpolation matrix M (out_size, in_size) s.t. y = M @ x matches
    torch F.interpolate(mode='bilinear', align_corners=False) along one axis."""
    scale = in_size / out_size
    dst = jnp.arange(out_size, dtype=jnp.float32)
    src = (dst + 0.5) * scale - 0.5
    src = jnp.maximum(src, 0.0)                      # PyTorch clamps negative src to 0
    x0 = jnp.floor(src)
    frac = src - x0
    x0i = jnp.clip(x0.astype(jnp.int32), 0, in_size - 1)
    x1i = jnp.minimum(x0i + 1, in_size - 1)
    rows = jnp.arange(out_size)
    m = jnp.zeros((out_size, in_size), jnp.float32)
    m = m.at[rows, x0i].add(1.0 - frac)
    m = m.at[rows, x1i].add(frac)
    return m


# ---------------------- VMEM / tiling heuristics ------------------------------
def _round_up(x, m):
    return ((int(x) + m - 1) // m) * m


def _block_bytes(shape, itemsize):
    """VMEM bytes of one block, accounting for (sublane, 128) tile padding of the last 2 dims."""
    if len(shape) == 0:
        return itemsize
    if len(shape) == 1:
        return _round_up(shape[0] * itemsize, 512)
    sub = max(8, 32 // itemsize)                     # 8 for f32, 16 for bf16, 32 for int8/fp8
    lead = 1
    for d in shape[:-2]:
        lead *= int(d)
    return lead * _round_up(shape[-2], sub) * _round_up(shape[-1], 128) * itemsize


def _vmem_limits():
    """(scoped vmem_limit_bytes, block budget) with headroom below physical VMEM.
    v7x: 64 MiB physical -> ~48/40 MiB;  v5e/v6e: 128 MiB -> ~96/81 MiB."""
    try:
        phys = int(pltpu.get_tpu_info().vmem_capacity_bytes)
    except Exception:
        phys = 64 * 1024 * 1024
    limit = min(phys * 3 // 4, 96 * 1024 * 1024)
    return limit, int(limit * 0.85)


def _num_tensorcores():
    """v7x has 2 TensorCores per chip (megacore grid sharding); v5e/v6e have 1."""
    try:
        kind = jax.devices()[0].device_kind.lower()
    except Exception:
        return 2
    return 2 if "7" in kind else 1


def _pick_batch_tile(B, block_bytes_fn, vmem_budget, num_cores):
    """Largest legal batch tile that fits the padded-VMEM budget. Blocks stay legal under the
    (8,128) rule (Bt == B or Bt % 8 == 0). On multi-core parts prefer >= 2 steps per core."""
    legal = [bt for bt in range(1, B + 1) if B % bt == 0 and (bt == B or bt % 8 == 0)]
    fitting = [bt for bt in legal if block_bytes_fn(bt) <= vmem_budget]
    if not fitting:
        return min(legal)

    def rank(bt):
        steps = B // bt
        if num_cores >= 2:
            if steps >= 2 * num_cores and steps % num_cores == 0:
                tier = 0
            elif steps >= num_cores:
                tier = 1
            else:
                tier = 2
        else:
            tier = 0                                   # single core: just take the biggest tile
        return (tier, -bt)

    return min(fitting, key=rank)


# ------------------------------ wrapper ---------------------------------------
def attention_map(fl, backward_features, H, W):
    B, C, Hf, Wf = fl.shape
    S, P = Hf * Wf, H * W

    # Channel weights = spatial mean of the grad-layer gradient, computed in plain JAX so the
    # kernel never reads the full backward_features tensor.
    weights = jnp.mean(backward_features, axis=(2, 3))               # (B, C)

    L = bilinear_matrix(H, Hf)                                       # (H, Hf)
    R = bilinear_matrix(W, Wf)                                       # (W, Wf)

    vmem_limit, vmem_budget = _vmem_limits()
    num_cores = _num_tensorcores()

    kt_resident = 2 * _block_bytes((S, P), 4)                        # double-buffered constant
    use_kron = kt_resident <= min(vmem_budget // 3, 16 * 1024 * 1024)

    if use_kron:
        fl_flat = fl.reshape(B, C, S)          # wrapper-side flatten -> lane-dense kernel blocks
        KT = jnp.kron(L, R).T                  # (S, P): Up_flat = Ac_flat @ KT

        def block_bytes(bt):
            return (2 * (_block_bytes((bt, C, S), fl_flat.dtype.itemsize)
                         + _block_bytes((bt, C), weights.dtype.itemsize)
                         + _block_bytes((bt, P), 4))
                    + kt_resident)

        Bt = _pick_batch_tile(B, block_bytes, vmem_budget, num_cores)
        out = pl.pallas_call(
            kron_attention_kernel,
            out_shape=jax.ShapeDtypeStruct((B, P), jnp.float32),
            grid_spec=pltpu.PrefetchScalarGridSpec(
                num_scalar_prefetch=0,
                grid=(B // Bt,),
                in_specs=[
                    pl.BlockSpec((Bt, C, S), lambda g: (g, 0, 0)),
                    pl.BlockSpec((Bt, C), lambda g: (g, 0)),
                    pl.BlockSpec((S, P), lambda g: (0, 0)),
                ],
                out_specs=pl.BlockSpec((Bt, P), lambda g: (g, 0)),
            ),
            compiler_params=pltpu.CompilerParams(
                dimension_semantics=("parallel",),
                vmem_limit_bytes=vmem_limit,
            ),
        )(fl_flat, weights, KT)
        return out.reshape(B, 1, H, W)

    # ---- separable fallback for large maps (kron matrix too big for VMEM) ----
    RT = R.T                                                          # (Wf, W)

    def block_bytes(bt):
        return 2 * (_block_bytes((bt, C, Hf, Wf), fl.dtype.itemsize)
                    + _block_bytes((bt, C), weights.dtype.itemsize)
                    + _block_bytes((H, Hf), 4)
                    + _block_bytes((Wf, W), 4)
                    + _block_bytes((bt, H, W), 4))

    Bt = _pick_batch_tile(B, block_bytes, vmem_budget, num_cores)
    out = pl.pallas_call(
        separable_attention_kernel,
        out_shape=jax.ShapeDtypeStruct((B, H, W), jnp.float32),
        grid_spec=pltpu.PrefetchScalarGridSpec(
            num_scalar_prefetch=0,
            grid=(B // Bt,),
            in_specs=[
                pl.BlockSpec((Bt, C, Hf, Wf), lambda g: (g, 0, 0, 0)),
                pl.BlockSpec((Bt, C), lambda g: (g, 0)),
                pl.BlockSpec((H, Hf), lambda g: (0, 0)),
                pl.BlockSpec((Wf, W), lambda g: (0, 0)),
            ],
            out_specs=pl.BlockSpec((Bt, H, W), lambda g: (g, 0, 0)),
        ),
        compiler_params=pltpu.CompilerParams(
            dimension_semantics=("parallel",),
            vmem_limit_bytes=vmem_limit,
        ),
    )(fl, weights, L, RT)
    return out.reshape(B, 1, H, W)


# ------------------------ synthetic wrapped model ----------------------------
def init_params(key, num_classes=2, c1=8, c2=16):
    k1, k2, k3, k4 = jax.random.split(key, 4)
    return {
        "conv1_w": 0.1 * jax.random.normal(k1, (c1, 3, 3, 3), jnp.float32),
        "conv2_w": 0.1 * jax.random.normal(k2, (c2, c1, 3, 3), jnp.float32),
        "fc_w":    0.1 * jax.random.normal(k3, (c2, num_classes), jnp.float32),
        "fc_b":    0.1 * jax.random.normal(k4, (num_classes,), jnp.float32),
    }


def _conv(x, w, stride):
    return lax.conv_general_dilated(
        x, w, window_strides=(stride, stride), padding=((1, 1), (1, 1)),
        dimension_numbers=("NCHW", "OIHW", "NCHW"))


def model_head(params, images):
    # "grad_layer": its output is what the forward hook captures (fl).
    return jax.nn.relu(_conv(images, params["conv1_w"], 2))          # (B, C1, H/2, W/2)


def model_tail(params, fl):
    h = jax.nn.relu(_conv(fl, params["conv2_w"], 2))                 # (B, C2, H/4, W/4)
    pooled = jnp.mean(h, axis=(2, 3))                                # (B, C2)
    return pooled @ params["fc_w"] + params["fc_b"]                  # (B, num_classes)


# --------------------------- module forward ----------------------------------
def batch_ran_deepfake_forward(params, images, labels):
    """Returns (logits_cl, scaled_ac) exactly like batch_RAN_Deepfake.forward.
    NOTE: `labels` (and labels_ohe / one-hot of argmax) are computed but never used
    downstream in the original forward, so they do not affect the output."""
    del labels
    B, _, H, W = images.shape

    # forward hook: feed_forward_features = fl
    fl = model_head(params, images)

    # logits_cl = model(images); backward hook via vjp:
    #   grad_logits = logits_cl.sum(dim=1); grad_logits.backward(gradient=ones)
    #   => cotangent on logits_cl is all-ones; backward_features = d(sum logits)/d fl
    logits_cl, vjp_fn = jax.vjp(lambda f: model_tail(params, f), fl)
    (backward_features,) = vjp_fn(jnp.ones_like(logits_cl))

    scaled_ac = attention_map(fl, backward_features, H, W)           # (B, 1, H, W)
    return logits_cl, scaled_ac


# --------------------------- pure-JAX reference --------------------------------
def attention_map_ref(fl, backward_features, H, W):
    B, C, Hf, Wf = fl.shape
    w = jnp.mean(backward_features, axis=(2, 3), keepdims=True)
    ac = jax.nn.relu(jnp.sum(fl * w, axis=1))                        # (B, Hf, Wf)
    L = bilinear_matrix(H, Hf)
    R = bilinear_matrix(W, Wf)
    up = jnp.einsum("hi,bij,wj->bhw", L, ac, R)
    a_min = jnp.min(up.reshape(B, -1), axis=1).reshape(B, 1, 1)
    a_max = jnp.max(up.reshape(B, -1), axis=1).reshape(B, 1, 1)
    return ((up - a_min) / (a_max - a_min + EPS)).reshape(B, 1, H, W)


if __name__ == "__main__":
    key = jax.random.PRNGKey(0)
    k_img, k_par = jax.random.split(key)

    B, H, W = 2, 16, 16
    images = jax.random.normal(k_img, (B, 3, H, W), jnp.float32)
    labels = jnp.array([0, 1], dtype=jnp.int32)
    params = init_params(k_par, num_classes=2)

    logits_cl, scaled_ac = jax.jit(batch_ran_deepfake_forward)(params, images, labels)
    jax.block_until_ready((logits_cl, scaled_ac))

    assert logits_cl.shape == (B, 2)
    assert scaled_ac.shape == (B, 1, H, W)
    assert bool(jnp.all(jnp.isfinite(scaled_ac)))

    # Cross-check the Pallas attention path against a pure-JAX reference.
    fl = model_head(params, images)
    logits_ref, vjp_fn = jax.vjp(lambda f: model_tail(params, f), fl)
    (bf,) = vjp_fn(jnp.ones_like(logits_ref))
    ref = attention_map_ref(fl, bf, H, W)
    assert float(jnp.max(jnp.abs(scaled_ac - ref))) < 1e-4

    print("KERNEL_OK")
</pallas_src>

<mosaic_0001>
module attributes {stable_mosaic.version = 11 : i64} {
  func.func @kron_attention_kernel(%arg0: i32, %arg1: memref<2x8x64xf32, #tpu.memory_space<vmem>>, %arg2: memref<2x8xf32, #tpu.memory_space<vmem>>, %arg3: memref<64x256xf32, #tpu.memory_space<vmem>>, %arg4: memref<2x256xf32, #tpu.memory_space<vmem>>) attributes {dimension_semantics = [#tpu.dimension_semantics<parallel>], iteration_bounds = array<i64: 1>, scalar_prefetch = 0 : i64, scratch_operands = 0 : i64, tpu.core_type = #tpu.core_type<tc>, window_params = [{transform_indices = @transform_0, window_bounds = array<i64: 2, 8, 64>}, {transform_indices = @transform_1, window_bounds = array<i64: 2, 8>}, {pipeline_mode = #tpu.pipeline_mode<synchronous>, transform_indices = @transform_2, window_bounds = array<i64: 64, 256>}, {transform_indices = @transform_3, window_bounds = array<i64: 2, 256>}]} {
    %c0 = arith.constant 0 : index
    %c0_0 = arith.constant 0 : index
    %c0_1 = arith.constant 0 : index
    %0 = vector.load %arg1[%c0, %c0_0, %c0_1] : memref<2x8x64xf32, #tpu.memory_space<vmem>>, vector<2x8x64xf32>
    %c0_2 = arith.constant 0 : index
    %c0_3 = arith.constant 0 : index
    %1 = vector.load %arg2[%c0_2, %c0_3] : memref<2x8xf32, #tpu.memory_space<vmem>>, vector<2x8xf32>
    %2 = vector.shape_cast %1 : vector<2x8xf32> to vector<2x8x1xf32>
    %3 = vector.broadcast %2 : vector<2x8x1xf32> to vector<2x8x64xf32>
    %4 = arith.mulf %0, %3 : vector<2x8x64xf32>
    %cst = arith.constant dense<0.000000e+00> : vector<2x64xf32>
    %5 = vector.multi_reduction <add>, %4, %cst [1] : vector<2x8x64xf32> to vector<2x64xf32>
    %cst_4 = arith.constant 0.000000e+00 : f32
    %6 = vector.broadcast %cst_4 : f32 to vector<2x64xf32>
    %7 = arith.maximumf %5, %6 : vector<2x64xf32>
    %c0_5 = arith.constant 0 : index
    %c0_6 = arith.constant 0 : index
    %8 = vector.load %arg3[%c0_5, %c0_6] : memref<64x256xf32, #tpu.memory_space<vmem>>, vector<64x256xf32>
    %cst_7 = arith.constant dense<0.000000e+00> : vector<2x256xf32>
    %9 = tpu.matmul %7, %8, %cst_7 {dimension_numbers = #tpu.dot_dimension_numbers<[1], [0], [0], [1], [0, 0, 1, 1], [], []>} : vector<2x64xf32>, vector<64x256xf32>, vector<2x256xf32> -> vector<2x256xf32>
    %cst_8 = arith.constant dense<0x7F800000> : vector<2xf32>
    %10 = vector.multi_reduction <minimumf>, %9, %cst_8 [1] : vector<2x256xf32> to vector<2xf32>
    %11 = vector.shape_cast %10 : vector<2xf32> to vector<2x1xf32>
    %cst_9 = arith.constant dense<0xFF800000> : vector<2xf32>
    %12 = vector.multi_reduction <maximumf>, %9, %cst_9 [1] : vector<2x256xf32> to vector<2xf32>
    %13 = vector.shape_cast %12 : vector<2xf32> to vector<2x1xf32>
    %14 = arith.subf %13, %11 : vector<2x1xf32>
    %cst_10 = arith.constant 2.22044605E-16 : f32
    %15 = vector.broadcast %cst_10 : f32 to vector<2x1xf32>
    %16 = arith.addf %14, %15 : vector<2x1xf32>
    %17 = tpu.reciprocal %16 : vector<2x1xf32> -> vector<2x1xf32>
    %18 = vector.broadcast %11 : vector<2x1xf32> to vector<2x256xf32>
    %19 = arith.subf %9, %18 : vector<2x256xf32>
    %20 = vector.broadcast %17 : vector<2x1xf32> to vector<2x256xf32>
    %21 = arith.mulf %19, %20 : vector<2x256xf32>
    %c0_11 = arith.constant 0 : index
    %c0_12 = arith.constant 0 : index
    %22 = vector.load %arg4[%c0_11, %c0_12] : memref<2x256xf32, #tpu.memory_space<vmem>>, vector<2x256xf32>
    tpu.vector_store %arg4[%c0_11, %c0_12], %21 {strides = array<i32>} : memref<2x256xf32, #tpu.memory_space<vmem>>, vector<2x256xf32>,
    return
  }
  func.func @transform_0(%arg0: i32) -> (i32, i32, i32) {
    %c0_i32 = arith.constant 0 : i32
    %c0_i32_0 = arith.constant 0 : i32
    %c0_i32_1 = arith.constant 0 : i32
    return %arg0, %c0_i32, %c0_i32_0 : i32, i32, i32
  }
  func.func @transform_1(%arg0: i32) -> (i32, i32) {
    %c0_i32 = arith.constant 0 : i32
    %c0_i32_0 = arith.constant 0 : i32
    return %arg0, %c0_i32 : i32, i32
  }
  func.func @transform_2(%arg0: i32) -> (i32, i32) {
    %c0_i32 = arith.constant 0 : i32
    %c0_i32_0 = arith.constant 0 : i32
    %c0_i32_1 = arith.constant 0 : i32
    return %c0_i32, %c0_i32_0 : i32, i32
  }
  func.func @transform_3(%arg0: i32) -> (i32, i32) {
    %c0_i32 = arith.constant 0 : i32
    %c0_i32_0 = arith.constant 0 : i32
    return %arg0, %c0_i32 : i32, i32
  }
}

</mosaic_0001>

<llo_original>
// kernel: batch_ran_deepfake_forward.1
$region0: #{batch_ran_deepfake_forward.1}
  #allocation0 [shape = 'u32[]', space=smem, size = 0x4, offset = 0x4, fixed_abs, tag = 'smem constant byte address 0x4 - core index']
  #allocation1 [shape = 'u32[72,128]{1,0:T(1,128)}', space=vmem, size = 0x9000, scoped, tag = 'internal scratch']
  %s0 = inlined_call_operand.vmem [shape: f32[2,8,64], index: 0, kind: input, shape index: {}]
  %s1 = inlined_call_operand.vmem [shape: f32[2,8], index: 1, kind: input, shape index: {}]
  %s2 = inlined_call_operand.vmem [shape: f32[64,256], index: 2, kind: input, shape index: {}]
  %s3 = inlined_call_operand.vmem [shape: f32[2,256], index: 3, kind: output, shape index: {}]
  %s4 = sld [smem:[#allocation0]]
  $region22: #{batch_ran_deepfake_forward.1} parent=0
    _
  %s6 = ssub.s32 1, %s4
  %s7 = scalar_select 0, %s6, %s4
  // Predicated region
  $region2: #{batch_ran_deepfake_forward.1} parent=0 // pred_check
    _
  $region3: #{batch_ran_deepfake_forward.1} parent=0 // pred_check_branch
    %9 = sbr.rel (0) target = $region5
  $region4: #{batch_ran_deepfake_forward.1} parent=0 // pred_region
    _
  $region5: #{batch_ran_deepfake_forward.1} parent=0 // pred_fallthru
    _
  // Predicated region
  $region6: #{batch_ran_deepfake_forward.1} parent=0 // pred_check
    _
  $region7: #{batch_ran_deepfake_forward.1} parent=0 // pred_check_branch
    %11 = sbr.rel (0) target = $region9
  $region8: #{batch_ran_deepfake_forward.1} parent=0 // pred_region
    _
  $region9: #{batch_ran_deepfake_forward.1} parent=0 // pred_fallthru
    _
  // Predicated region
  $region10: #{batch_ran_deepfake_forward.1} parent=0 // pred_check
    _
  $region11: #{batch_ran_deepfake_forward.1} parent=0 // pred_check_branch
    %13 = sbr.rel (0) target = $region13
  $region12: #{batch_ran_deepfake_forward.1} parent=0 // pred_region
    _
  $region13: #{batch_ran_deepfake_forward.1} parent=0 // pred_fallthru
    _
  %v14 = vld [vmem:[%s0] sm:$0xff]
  %v15 = vld [vmem:[%s0 + $0x8] sm:$0xff]
  %v16 = vld [vmem:[%s1] sm:$0x3]
  %v17 = vperm.slane %v16, 0
  %v18 = vlaneseq
  %v19 = vshrl.u32 %v18, 7
  %21 = vset.pattern.permute.xlu0 %v19
  %22 = vperm.xlu0 %21, %v17
  %v23 = vpop.permute.xlu0 %22
  %v24 = vperm.slane %v16, 1
  %v25 = vlaneseq
  %v26 = vshrl.u32 %v25, 7
  %28 = vset.pattern.permute.xlu0 %v26
  %29 = vperm.xlu0 %28, %v24
  %v30 = vpop.permute.xlu0 %29
  %v31 = vmul.f32 %v14, %v23
  %v32 = vmul.f32 %v15, %v30
  %vm33 = vcmask 523264
  %v34 = vsel %vm33, %v31, 0.0
  %v35 = vrot.slane %v34, 4
  %v36 = vadd.f32 %v34, %v35
  %v37 = vrot.slane %v36, 2
  %v38 = vadd.f32 %v36, %v37
  %v39 = vrot.slane %v38, 1
  %v40 = vadd.f32 %v38, %v39
  %v41 = vsel %vm33, %v32, 0.0
  %v42 = vrot.slane %v41, 4
  %v43 = vadd.f32 %v41, %v42
  %v44 = vrot.slane %v43, 2
  %v45 = vadd.f32 %v43, %v44
  %v46 = vrot.slane %v45, 1
  %v47 = vadd.f32 %v45, %v46
  %v48 = vmax.f32 %v40, 0.0
  %v49 = vmax.f32 %v47, 0.0
  %v50 = vld [vmem:[%s2] sm:$0xff]
  %v51 = vld [vmem:[%s2 + $0x8] sm:$0xff]
  %v52 = vld [vmem:[%s2 + $0x10] sm:$0xff]
  %v53 = vld [vmem:[%s2 + $0x18] sm:$0xff]
  %v54 = vld [vmem:[%s2 + $0x20] sm:$0xff]
  %v55 = vld [vmem:[%s2 + $0x28] sm:$0xff]
  %v56 = vld [vmem:[%s2 + $0x30] sm:$0xff]
  %v57 = vld [vmem:[%s2 + $0x38] sm:$0xff]
  %v58 = vld [vmem:[%s2 + $0x40] sm:$0xff]
  %v59 = vld [vmem:[%s2 + $0x48] sm:$0xff]
  %v60 = vld [vmem:[%s2 + $0x50] sm:$0xff]
  %v61 = vld [vmem:[%s2 + $0x58] sm:$0xff]
  %v62 = vld [vmem:[%s2 + $0x60] sm:$0xff]
  %v63 = vld [vmem:[%s2 + $0x68] sm:$0xff]
  %v64 = vld [vmem:[%s2 + $0x70] sm:$0xff]
  %v65 = vld [vmem:[%s2 + $0x78] sm:$0xff]
  %vm68 = vcmask 1041409
  %v69 = vsel %vm68, %v49, %v48
  %v70 = vsel %vm33, %v69, 0
  %72 = vmatpush.msra.mxu0 0.0
  %73 = vmatpush.msra.mxu0 0.0
  %74 = vmatpush.msra.mxu0 0.0
  %75 = vmatpush.msra.mxu0 0.0
  %76 = vmatpush.msra.mxu0 0.0
  %77 = vmatpush.msra.mxu0 0.0
  %78 = vmatpush.msra.mxu0 0.0
  %79 = vmatpush.msra.mxu0 0.0
  %80 = vmatpush.msra.mxu0 %v64
  %81 = vmatpush.msra.mxu0 %v62
  %82 = vmatpush.msra.mxu0 %v60
  %83 = vmatpush.msra.mxu0 %v58
  %84 = vmatpush.msra.mxu0 %v56
  %85 = vmatpush.msra.mxu0 %v54
  %86 = vmatpush.msra.mxu0 %v52
  %87 = vmatpush.msra.mxu0 %v50
  %88 = vmatmul.f32.gmra.mxu0 %v70
  %v89 = vpop.f32.mrf.mxu0
  %v90 = vadd.f32 0.0, %v89
  %91 = vdwg.mxu0
  %92 = vmatpush.msra.mxu0 0.0
  %93 = vmatpush.msra.mxu0 0.0
  %94 = vmatpush.msra.mxu0 0.0
  %95 = vmatpush.msra.mxu0 0.0
  %96 = vmatpush.msra.mxu0 0.0
  %97 = vmatpush.msra.mxu0 0.0
  %98 = vmatpush.msra.mxu0 0.0
  %99 = vmatpush.msra.mxu0 0.0
  %100 = vmatpush.msra.mxu0 %v65
  %101 = vmatpush.msra.mxu0 %v63
  %102 = vmatpush.msra.mxu0 %v61
  %103 = vmatpush.msra.mxu0 %v59
  %104 = vmatpush.msra.mxu0 %v57
  %105 = vmatpush.msra.mxu0 %v55
  %106 = vmatpush.msra.mxu0 %v53
  %107 = vmatpush.msra.mxu0 %v51
  %108 = vmatmul.f32.gmra.mxu0 %v70
  %v109 = vpop.f32.mrf.mxu0
  %v110 = vadd.f32 0.0, %v109
  %111 = vdwg.mxu0
  %vm112 = vcmask 1041408
  %v113 = vsel %vm112, %v90, inf
  %v114 = vsel %vm112, %v110, inf
  %v115 = vmin.f32 %v113, %v114
  %116 = vmin.xlane.f32.xlu0 %v115
  %v117 = vpop.xlane.xlu0 %116
  %v118 = vsel %vm112, %v90, -inf
  %v119 = vsel %vm112, %v110, -inf
  %v120 = vmax.f32 %v118, %v119
  %121 = vmax.xlane.f32.xlu0 %v120
  %v122 = vpop.xlane.xlu0 %121
  %v123 = vsub.f32 %v122, %v117
  %v124 = vadd.f32 %v123, 2.220446e-16
  %v125 = vrcp.pop %v124
  %v126 = vmul.f32 %v124, %v125
  %v127 = vsub.f32 1.0, %v126
  %v128 = vmul.f32 %v125, %v127
  %v129 = vadd.f32 %v125, %v128
  %vm130 = vweird.f32 %v124
  %vm131 = vweird.f32 %v125
  %vm132 = vmor %vm130, %vm131
  %v133 = vsel %vm132, %v125, %v129
  %v134 = vand.u32 2147483647, %v124
  %vm135 = vcmp.eq.f32.partialorder %v134, 8.507059e+37
  %v136 = vand.u32 %v124, 2147483648
  %v137 = vor.u32 1.1754944e-38, %v136
  %v138 = vsel %vm135, %v137, %v133
  %v139 = vsub.f32 %v90, %v117
  %v140 = vsub.f32 %v110, %v117
  %v141 = vmul.f32 %v139, %v138
  %v142 = vmul.f32 %v140, %v138
  %v145 = vrot.slane %v142, 6
  %v146 = vsel %vm112, %v141, %v145
  %148 = vst [vmem:[%s3] sm:$0xf] %v146
  // Predicated region
  $region14: #{batch_ran_deepfake_forward.1} parent=0 // pred_check
    _
  $region15: #{batch_ran_deepfake_forward.1} parent=0 // pred_check_branch
    %150 = sbr.rel (0) target = $region17
  $region16: #{batch_ran_deepfake_forward.1} parent=0 // pred_region
    _
  $region17: #{batch_ran_deepfake_forward.1} parent=0 // pred_fallthru
    _
  // Predicated region
  $region18: #{batch_ran_deepfake_forward.1} parent=0 // pred_check
    _
  $region19: #{batch_ran_deepfake_forward.1} parent=0 // pred_check_branch
    %152 = sbr.rel (0) target = $region21
  $region20: #{batch_ran_deepfake_forward.1} parent=0 // pred_region
    _
  $region21: #{batch_ran_deepfake_forward.1} parent=0 // pred_fallthru
    _

</llo_original>
